<compile_context>
chip_gen: v5e
topology: v5e:2x2
jax: 0.10.0
libtpu: 0.0.40
codegen_flags: <defaults>
</compile_context>

<pallas_src>
import jax
import jax.numpy as jnp
from jax.experimental import pallas as pl
from jax.experimental.pallas import tpu as pltpu


def _make_predictor_kernel(bn, tl, tsub, compute_dtype):
    nsub = tl // tsub

    def kernel(x_ref, w1_ref, w2_ref, shift_ref, o_ref):
        # x_ref:     (bn, C, tl)  input tile, original dtype (f32) -> cast in-kernel
        # w1_ref:    (C, C)       conv1 weight with BN scale folded into its rows
        # w2_ref:    (C, C)       conv2 weight
        # shift_ref: (C, 1)       beta - running_mean * scale   (f32)
        # o_ref:     (bn, C, tl)  output tile (out dtype)
        w1 = w1_ref[...]
        w2 = w2_ref[...]
        shift = shift_ref[...]
        for b in range(bn):            # static unroll: bn is small (<= 8)
            for s in range(nsub):      # static unroll: keeps the f32 intermediate small
                lo = s * tsub
                x = x_ref[b, :, pl.ds(lo, tsub)].astype(compute_dtype)      # (C, tsub)
                y = jnp.dot(w1, x, preferred_element_type=jnp.float32)      # conv1 (+BN scale)
                y = jnp.maximum(y + shift, 0.0)                             # BN shift + ReLU (f32)
                out = jnp.dot(w2, y.astype(compute_dtype),                  # conv2
                              preferred_element_type=jnp.float32)
                o_ref[b, :, pl.ds(lo, tsub)] = out.astype(o_ref.dtype)

    return kernel


def _pick_tiles(n, c, hw, in_bytes, out_bytes, target_bytes=2 << 20, max_bn=8):
    """Pick (batch block, spatial tile) so each grid step moves ~target_bytes of HBM."""
    per_lane = c * (in_bytes + out_bytes)        # HBM bytes per spatial element per image
    lane_divs = [d for d in range(128, hw + 1, 128) if hw % d == 0]
    if lane_divs:
        fitting = [d for d in lane_divs if d * per_lane <= target_bytes]
        tl = max(fitting) if fitting else min(lane_divs)
    else:
        # TODO(synk): H*W with no multiple-of-128 divisor -> full-extent block
        # (masked lane stores). Correct, just a perf cliff for odd spatial sizes.
        tl = hw
    bn = 1
    for d in range(min(n, max_bn), 0, -1):
        if n % d == 0 and d * tl * per_lane <= target_bytes:
            bn = d
            break
    # v7x has 2 TensorCores: keep >=2 grid steps when each chunk would still be fat.
    if (n // bn) * (hw // tl) == 1:
        if bn % 2 == 0 and (bn // 2) * tl * per_lane >= (1 << 20):
            bn //= 2
        elif tl % 256 == 0 and hw % (tl // 2) == 0 and bn * (tl // 2) * per_lane >= (1 << 20):
            tl //= 2
    return bn, tl


def _pick_subtile(tl, c):
    """In-kernel spatial chunk so the (C, tsub) f32 intermediate stays small for big C."""
    if c < 256:
        return tl
    for cand in (512, 256, 128):
        if tl % cand == 0:
            return cand
    return tl


def _vmem_ceiling_bytes():
    try:
        cap = int(pltpu.get_tpu_info().vmem_capacity_bytes)
    except Exception:
        cap = 64 << 20      # conservative fallback = v7x physical VMEM
    # Leave headroom below physical; allow up to 96 MiB on 128 MiB chips (v5e/v6e).
    return max(32 << 20, min((cap * 3) // 4, 96 << 20))


def predictor_forward(x_nchw, w1, w2, gamma, beta, running_mean, running_var,
                      eps=1e-5, compute_dtype=jnp.bfloat16, out_dtype=None):
    """x_nchw: (N, C, H, W).  w1/w2: (C, C) = PyTorch 1x1-conv weights squeezed.
    Eval-mode BatchNorm (running stats).  out_dtype defaults to compute_dtype;
    pass compute_dtype=jnp.float32 for an exact-precision escape hatch."""
    N, C, H, W = x_nchw.shape
    assert w1.shape == (C, C) and w2.shape == (C, C), (
        "Predictor requires in_plane == out_plane (bn1 = BatchNorm2d(in_plane) is "
        "applied to conv1's output)")
    if out_dtype is None:
        out_dtype = compute_dtype
    HW = H * W

    in_bytes = jnp.dtype(x_nchw.dtype).itemsize
    out_bytes = jnp.dtype(out_dtype).itemsize
    cdt_bytes = jnp.dtype(compute_dtype).itemsize

    bn, tl = _pick_tiles(N, C, HW, in_bytes, out_bytes)
    tsub = _pick_subtile(tl, C)
    grid = (N // bn, HW // tl)

    # Fold eval-mode BN scale into conv1's output rows; keep only the (C,1) shift add.
    scale = gamma / jnp.sqrt(running_var + eps)
    shift = (beta - running_mean * scale).astype(jnp.float32).reshape(C, 1)
    w1_folded = (w1 * scale[:, None]).astype(compute_dtype)
    w2_c = w2.astype(compute_dtype)

    # NCHW is already channels-major over contiguous spatial: flatten only (free).
    # No transpose, and NO host-side dtype cast (the cast happens inside the kernel).
    x3 = x_nchw.reshape(N, C, HW)

    cost = pl.CostEstimate(
        flops=4 * N * HW * C * C,                               # two (C,C)x(C,HW) matmuls
        transcendentals=0,
        bytes_accessed=N * C * HW * (in_bytes + out_bytes)      # f32 in, out_dtype out
                       + 2 * C * C * cdt_bytes + C * 4,
    )

    step_in = bn * C * tl * in_bytes
    step_out = bn * C * tl * out_bytes
    weights = 2 * C * C * cdt_bytes
    inter = C * tsub * (4 + cdt_bytes)                          # f32 intermediate + recast copy
    vmem_needed = 2 * (step_in + step_out) + 2 * weights + C * 4 + inter
    vmem_limit = int(min(max(2 * vmem_needed, 32 << 20), _vmem_ceiling_bytes()))

    kernel = _make_predictor_kernel(bn, tl, tsub, compute_dtype)

    out3 = pl.pallas_call(
        kernel,
        out_shape=jax.ShapeDtypeStruct((N, C, HW), out_dtype),
        grid_spec=pltpu.PrefetchScalarGridSpec(
            num_scalar_prefetch=0,
            grid=grid,
            in_specs=[
                pl.BlockSpec((bn, C, tl), lambda n, s: (n, 0, s)),  # x tile (lane = spatial)
                pl.BlockSpec((C, C), lambda n, s: (0, 0)),          # w1 (BN-folded, resident)
                pl.BlockSpec((C, C), lambda n, s: (0, 0)),          # w2 (resident)
                pl.BlockSpec((C, 1), lambda n, s: (0, 0)),          # BN shift (resident)
            ],
            out_specs=pl.BlockSpec((bn, C, tl), lambda n, s: (n, 0, s)),
        ),
        compiler_params=pltpu.CompilerParams(
            dimension_semantics=("parallel", "parallel"),
            vmem_limit_bytes=vmem_limit,
        ),
        cost_estimate=cost,
    )(x3, w1_folded, w2_c, shift)

    # (N, C, HW) -> (N, C, H, W): free reshape, no transpose.
    return out3.reshape(N, C, H, W)


def _reference_forward(x_nchw, w1, w2, gamma, beta, running_mean, running_var, eps=1e-5):
    # Pure-JAX f32 reference (eval-mode BN), for a sanity check only.
    y = jnp.einsum("nchw,oc->nohw", x_nchw, w1)
    inv = gamma / jnp.sqrt(running_var + eps)
    y = y * inv[None, :, None, None] + (beta - running_mean * inv)[None, :, None, None]
    y = jnp.maximum(y, 0.0)
    return jnp.einsum("nchw,oc->nohw", y, w2)


if __name__ == "__main__":
    N, C, H, W = 2, 4, 16, 16   # in_plane == out_plane == C (required by the module itself)
    key = jax.random.PRNGKey(0)
    kx, k1, k2, kg, kb, km, kv = jax.random.split(key, 7)

    x = jax.random.normal(kx, (N, C, H, W), dtype=jnp.float32)

    # Deterministic synthetic parameters (shapes as in the PyTorch __init__).
    w1 = jax.random.normal(k1, (C, C), dtype=jnp.float32) * 0.1   # conv1.weight (out,in,1,1) squeezed
    w2 = jax.random.normal(k2, (C, C), dtype=jnp.float32) * 0.1   # conv2.weight
    gamma = 1.0 + 0.1 * jax.random.normal(kg, (C,), dtype=jnp.float32)
    beta = 0.1 * jax.random.normal(kb, (C,), dtype=jnp.float32)
    running_mean = 0.1 * jax.random.normal(km, (C,), dtype=jnp.float32)
    running_var = jnp.abs(jax.random.normal(kv, (C,), dtype=jnp.float32)) + 0.5

    out = predictor_forward(x, w1, w2, gamma, beta, running_mean, running_var)
    out = jax.block_until_ready(out)

    ref = _reference_forward(x, w1, w2, gamma, beta, running_mean, running_var)
    assert out.shape == (N, C, H, W)
    # bf16 matmul operands + bf16 output (f32 MXU accumulation) -> relaxed tolerance.
    assert jnp.allclose(out.astype(jnp.float32), ref, atol=5e-2, rtol=5e-2)

    print("KERNEL_OK")
</pallas_src>

<mosaic_0001>
module attributes {stable_mosaic.version = 11 : i64} {
  func.func @kernel(%arg0: i32, %arg1: i32, %arg2: memref<2x4x256xf32, #tpu.memory_space<vmem>>, %arg3: memref<4x4xbf16, #tpu.memory_space<vmem>>, %arg4: memref<4x4xbf16, #tpu.memory_space<vmem>>, %arg5: memref<4x1xf32, #tpu.memory_space<vmem>>, %arg6: memref<2x4x256xbf16, #tpu.memory_space<vmem>>) attributes {dimension_semantics = [#tpu.dimension_semantics<parallel>, #tpu.dimension_semantics<parallel>], iteration_bounds = array<i64: 1, 1>, scalar_prefetch = 0 : i64, scratch_operands = 0 : i64, tpu.core_type = #tpu.core_type<tc>, window_params = [{transform_indices = @transform_0, window_bounds = array<i64: 2, 4, 256>}, {pipeline_mode = #tpu.pipeline_mode<synchronous>, transform_indices = @transform_1, window_bounds = array<i64: 4, 4>}, {pipeline_mode = #tpu.pipeline_mode<synchronous>, transform_indices = @transform_2, window_bounds = array<i64: 4, 4>}, {pipeline_mode = #tpu.pipeline_mode<synchronous>, transform_indices = @transform_3, window_bounds = array<i64: 4, 1>}, {transform_indices = @transform_4, window_bounds = array<i64: 2, 4, 256>}]} {
    %c0 = arith.constant 0 : index
    %c0_0 = arith.constant 0 : index
    %0 = vector.load %arg3[%c0, %c0_0] : memref<4x4xbf16, #tpu.memory_space<vmem>>, vector<4x4xbf16>
    %c0_1 = arith.constant 0 : index
    %c0_2 = arith.constant 0 : index
    %1 = vector.load %arg4[%c0_1, %c0_2] : memref<4x4xbf16, #tpu.memory_space<vmem>>, vector<4x4xbf16>
    %c0_3 = arith.constant 0 : index
    %c0_4 = arith.constant 0 : index
    %2 = vector.load %arg5[%c0_3, %c0_4] : memref<4x1xf32, #tpu.memory_space<vmem>>, vector<4x1xf32>
    %c0_5 = arith.constant 0 : index
    %c0_6 = arith.constant 0 : index
    %c0_7 = arith.constant 0 : index
    %3 = vector.load %arg2[%c0_5, %c0_6, %c0_7] : memref<2x4x256xf32, #tpu.memory_space<vmem>>, vector<1x4x256xf32>
    %4 = vector.shape_cast %3 : vector<1x4x256xf32> to vector<4x256xf32>
    %5 = arith.truncf %4 : vector<4x256xf32> to vector<4x256xbf16>
    %cst = arith.constant dense<0.000000e+00> : vector<4x256xf32>
    %6 = tpu.matmul %0, %5, %cst {dimension_numbers = #tpu.dot_dimension_numbers<[1], [0], [0], [1], [0, 0, 1, 1], [], []>} : vector<4x4xbf16>, vector<4x256xbf16>, vector<4x256xf32> -> vector<4x256xf32>
    %7 = vector.broadcast %2 : vector<4x1xf32> to vector<4x256xf32>
    %8 = arith.addf %6, %7 : vector<4x256xf32>
    %cst_8 = arith.constant 0.000000e+00 : f32
    %9 = vector.broadcast %cst_8 : f32 to vector<4x256xf32>
    %10 = arith.maximumf %8, %9 : vector<4x256xf32>
    %11 = arith.truncf %10 : vector<4x256xf32> to vector<4x256xbf16>
    %cst_9 = arith.constant dense<0.000000e+00> : vector<4x256xf32>
    %12 = tpu.matmul %1, %11, %cst_9 {dimension_numbers = #tpu.dot_dimension_numbers<[1], [0], [0], [1], [0, 0, 1, 1], [], []>} : vector<4x4xbf16>, vector<4x256xbf16>, vector<4x256xf32> -> vector<4x256xf32>
    %13 = arith.truncf %12 : vector<4x256xf32> to vector<4x256xbf16>
    %c0_10 = arith.constant 0 : index
    %c0_11 = arith.constant 0 : index
    %c0_12 = arith.constant 0 : index
    %14 = vector.load %arg6[%c0_10, %c0_11, %c0_12] : memref<2x4x256xbf16, #tpu.memory_space<vmem>>, vector<1x4x256xbf16>
    %15 = vector.shape_cast %14 : vector<1x4x256xbf16> to vector<4x256xbf16>
    %16 = vector.shape_cast %13 : vector<4x256xbf16> to vector<1x4x256xbf16>
    tpu.vector_store %arg6[%c0_10, %c0_11, %c0_12], %16 {strides = array<i32>} : memref<2x4x256xbf16, #tpu.memory_space<vmem>>, vector<1x4x256xbf16>,
    %c1 = arith.constant 1 : index
    %c0_13 = arith.constant 0 : index
    %c0_14 = arith.constant 0 : index
    %17 = vector.load %arg2[%c1, %c0_13, %c0_14] : memref<2x4x256xf32, #tpu.memory_space<vmem>>, vector<1x4x256xf32>
    %18 = vector.shape_cast %17 : vector<1x4x256xf32> to vector<4x256xf32>
    %19 = arith.truncf %18 : vector<4x256xf32> to vector<4x256xbf16>
    %cst_15 = arith.constant dense<0.000000e+00> : vector<4x256xf32>
    %20 = tpu.matmul %0, %19, %cst_15 {dimension_numbers = #tpu.dot_dimension_numbers<[1], [0], [0], [1], [0, 0, 1, 1], [], []>} : vector<4x4xbf16>, vector<4x256xbf16>, vector<4x256xf32> -> vector<4x256xf32>
    %21 = vector.broadcast %2 : vector<4x1xf32> to vector<4x256xf32>
    %22 = arith.addf %20, %21 : vector<4x256xf32>
    %cst_16 = arith.constant 0.000000e+00 : f32
    %23 = vector.broadcast %cst_16 : f32 to vector<4x256xf32>
    %24 = arith.maximumf %22, %23 : vector<4x256xf32>
    %25 = arith.truncf %24 : vector<4x256xf32> to vector<4x256xbf16>
    %cst_17 = arith.constant dense<0.000000e+00> : vector<4x256xf32>
    %26 = tpu.matmul %1, %25, %cst_17 {dimension_numbers = #tpu.dot_dimension_numbers<[1], [0], [0], [1], [0, 0, 1, 1], [], []>} : vector<4x4xbf16>, vector<4x256xbf16>, vector<4x256xf32> -> vector<4x256xf32>
    %27 = arith.truncf %26 : vector<4x256xf32> to vector<4x256xbf16>
    %c1_18 = arith.constant 1 : index
    %c0_19 = arith.constant 0 : index
    %c0_20 = arith.constant 0 : index
    %28 = vector.load %arg6[%c1_18, %c0_19, %c0_20] : memref<2x4x256xbf16, #tpu.memory_space<vmem>>, vector<1x4x256xbf16>
    %29 = vector.shape_cast %28 : vector<1x4x256xbf16> to vector<4x256xbf16>
    %30 = vector.shape_cast %27 : vector<4x256xbf16> to vector<1x4x256xbf16>
    tpu.vector_store %arg6[%c1_18, %c0_19, %c0_20], %30 {strides = array<i32>} : memref<2x4x256xbf16, #tpu.memory_space<vmem>>, vector<1x4x256xbf16>,
    return
  }
  func.func @transform_0(%arg0: i32, %arg1: i32) -> (i32, i32, i32) {
    %c0_i32 = arith.constant 0 : i32
    %c0_i32_0 = arith.constant 0 : i32
    return %arg0, %c0_i32, %arg1 : i32, i32, i32
  }
  func.func @transform_1(%arg0: i32, %arg1: i32) -> (i32, i32) {
    %c0_i32 = arith.constant 0 : i32
    %c0_i32_0 = arith.constant 0 : i32
    %c0_i32_1 = arith.constant 0 : i32
    return %c0_i32, %c0_i32_0 : i32, i32
  }
  func.func @transform_2(%arg0: i32, %arg1: i32) -> (i32, i32) {
    %c0_i32 = arith.constant 0 : i32
    %c0_i32_0 = arith.constant 0 : i32
    %c0_i32_1 = arith.constant 0 : i32
    return %c0_i32, %c0_i32_0 : i32, i32
  }
  func.func @transform_3(%arg0: i32, %arg1: i32) -> (i32, i32) {
    %c0_i32 = arith.constant 0 : i32
    %c0_i32_0 = arith.constant 0 : i32
    %c0_i32_1 = arith.constant 0 : i32
    return %c0_i32, %c0_i32_0 : i32, i32
  }
  func.func @transform_4(%arg0: i32, %arg1: i32) -> (i32, i32, i32) {
    %c0_i32 = arith.constant 0 : i32
    %c0_i32_0 = arith.constant 0 : i32
    return %arg0, %c0_i32, %arg1 : i32, i32, i32
  }
}

</mosaic_0001>

<llo_original>
// kernel: tpu_custom_call.1
$region0: #{tpu_custom_call.1}
  #allocation0 [shape = 'u32[]', space=smem, size = 0x4, offset = 0x4, fixed_abs, tag = 'smem constant byte address 0x4 - core index']
  #allocation1 [shape = 'u32[72,128]{1,0:T(1,128)}', space=vmem, size = 0x9000, scoped, tag = 'internal scratch']
  %s0 = inlined_call_operand.hbm [shape: f32[2,4,256], index: 0, kind: input, shape index: {}]
  %s1 = inlined_call_operand.vmem [shape: bf16[4,4], index: 1, kind: input, shape index: {}]
  %s2 = inlined_call_operand.vmem [shape: bf16[4,4], index: 2, kind: input, shape index: {}]
  %s3 = inlined_call_operand.vmem [shape: f32[4,1], index: 3, kind: input, shape index: {}]
  %s4 = inlined_call_operand.hbm [shape: bf16[2,4,256], index: 4, kind: output, shape index: {}]
  %s5 = sld [smem:[#allocation0]]
  $region30: #{tpu_custom_call.1} parent=0
    _
  %s7 = ssub.s32 1, %s5
  %s8 = scalar_select 0, %s7, %s5
  $region1: #{tpu_custom_call.1} parent=0
    #allocation2 [shape = 'u8[8192]{0}', space=vmem, size = 0x2000, scoped, tag = 'input window, operand 0, single buffered']
    #allocation3 [shape = 's32[1]{0}', space=sflag, size = 0x4, scoped, tag = 'scoped memory for tpu_custom_call.1']
    #allocation4 [shape = 's32[1]{0}', space=sflag, size = 0x4, scoped, tag = 'scoped memory for tpu_custom_call.1']
    #allocation5 [shape = 'u8[4096]{0}', space=vmem, size = 0x1000, scoped, tag = 'output window, operand 0, single buffered']
    %9 = vsyncpa [#allocation3], 0
    %10 = vsyncpa [#allocation4], 0
    // Predicated region
    $region2: #{tpu_custom_call.1} parent=1 // pred_check
      _
    $region3: #{tpu_custom_call.1} parent=1 // pred_check_branch
      %12 = sbr.rel (0) target = $region5
    $region4: #{tpu_custom_call.1} parent=1 // pred_region
      %14 = vsyncadd [#allocation3], 0
      %s15 = sshll.u32 %s0, 4
      %s16 = int_to_ptr.hbm [resolvable:$true] %s15
      %s17 = sshll.u32 [#allocation2], 4
      %s18 = int_to_ptr.vmem [resolvable:$true] %s17
      %23 = dma.hbm_to_vmem [thread:$0]  %s16, 256, %s18, [#allocation3], 128, 128, 8
    $region5: #{tpu_custom_call.1} parent=1 // pred_fallthru
      _
    // Predicated region
    $region6: #{tpu_custom_call.1} parent=1 // pred_check
      _
    $region7: #{tpu_custom_call.1} parent=1 // pred_check_branch
      %25 = sbr.rel (0) target = $region9
    $region8: #{tpu_custom_call.1} parent=1 // pred_region
      _
    $region9: #{tpu_custom_call.1} parent=1 // pred_fallthru
      _
    // Predicated region
    $region10: #{tpu_custom_call.1} parent=1 // pred_check
      _
    $region11: #{tpu_custom_call.1} parent=1 // pred_check_branch
      %27 = sbr.rel (0) target = $region13
    $region12: #{tpu_custom_call.1} parent=1 // pred_region
      _
    $region13: #{tpu_custom_call.1} parent=1 // pred_fallthru
      _
    // Predicated region
    $region14: #{tpu_custom_call.1} parent=1 // pred_check
      _
    $region15: #{tpu_custom_call.1} parent=1 // pred_check_branch
      %29 = sbr.rel (0) target = $region17
    $region16: #{tpu_custom_call.1} parent=1 // pred_region
      _
    $region17: #{tpu_custom_call.1} parent=1 // pred_fallthru
      _
    // Predicated region
    $region18: #{tpu_custom_call.1} parent=1 // pred_check
      _
    $region19: #{tpu_custom_call.1} parent=1 // pred_check_branch
      %31 = sbr.rel (0) target = $region21
    $region20: #{tpu_custom_call.1} parent=1 // pred_region
      %33 = dma.done [#allocation3], 256
    $region21: #{tpu_custom_call.1} parent=1 // pred_fallthru
      _
    %v35 = vld [vmem:[%s1] sm:$0x3]
    %v36 = vld [vmem:[%s2] sm:$0x3]
    %v37 = vld [vmem:[%s3] sm:$0xf]
    %v38 = vld [vmem:[#allocation2] sm:$0xff]
    %40 = vst [vmem:[#allocation1] ss:$2 sm:$0xff] %v38
    %v41 = vld.sshfl [vmem:[#allocation1] sm:$0xff pattern:$0x75316420]
    %v42 = vld.sshfl [vmem:[#allocation1 + $0x8] sm:$0xff pattern:$0x75316420]
    %v45 = vpack.c.bf16 %v41, %v41
    %v46 = vpack.c.bf16 %v42, %v42
    %48 = vset.pattern.permute.xlu0 0
    %49 = vperm.xlu0 %48, %v37
    %v50 = vpop.permute.xlu0 %49
    %vm52 = vcmask 31744
    %v54 = vsel %vm52, %v35, 0
    %vm56 = vcmask 1041408
    %v58 = vsel %vm56, %v45, 0
    %v61 = vsel %vm56, %v46, 0
    %63 = vmatpush.bf16.msra.mxu0 0
    %64 = vmatpush.bf16.msra.mxu0 0
    %65 = vmatpush.bf16.msra.mxu0 0
    %66 = vmatpush.bf16.msra.mxu0 0
    %67 = vmatpush.bf16.msra.mxu0 0
    %68 = vmatpush.bf16.msra.mxu0 0
    %69 = vmatpush.bf16.msra.mxu0 0
    %70 = vmatpush.bf16.msra.mxu0 %v58
    %71 = vmatmul.bf16.gmra.mxu0 %v54
    %v72 = vpop.f32.mrf.mxu0
    %v73 = vadd.f32 %v50, %v72
    %v74 = vpop.f32.mrf.mxu0
    %75 = vdwg.mxu0
    %76 = vmatpush.bf16.msra.mxu0 0
    %77 = vmatpush.bf16.msra.mxu0 0
    %78 = vmatpush.bf16.msra.mxu0 0
    %79 = vmatpush.bf16.msra.mxu0 0
    %80 = vmatpush.bf16.msra.mxu0 0
    %81 = vmatpush.bf16.msra.mxu0 0
    %82 = vmatpush.bf16.msra.mxu0 0
    %83 = vmatpush.bf16.msra.mxu0 %v61
    %84 = vmatmul.bf16.gmra.mxu0 %v54
    %v85 = vpop.f32.mrf.mxu0
    %v86 = vadd.f32 %v50, %v85
    %v87 = vpop.f32.mrf.mxu0
    %88 = vdwg.mxu0
    %v89 = vmax.f32 %v73, 0.0
    %v90 = vmax.f32 %v86, 0.0
    %v91 = vpack.c.bf16 %v89, %v89
    %v92 = vpack.c.bf16 %v90, %v90
    %v94 = vsel %vm52, %v36, 0
    %v97 = vsel %vm56, %v91, 0
    %v100 = vsel %vm56, %v92, 0
    %102 = vmatpush.bf16.msra.mxu0 0
    %103 = vmatpush.bf16.msra.mxu0 0
    %104 = vmatpush.bf16.msra.mxu0 0
    %105 = vmatpush.bf16.msra.mxu0 0
    %106 = vmatpush.bf16.msra.mxu0 0
    %107 = vmatpush.bf16.msra.mxu0 0
    %108 = vmatpush.bf16.msra.mxu0 0
    %109 = vmatpush.bf16.msra.mxu0 %v97
    %110 = vmatmul.bf16.gmra.mxu0 %v94
    %v111 = vpop.f32.mrf.mxu0
    %v112 = vadd.f32 0.0, %v111
    %v113 = vpop.f32.mrf.mxu0
    %114 = vdwg.mxu0
    %115 = vmatpush.bf16.msra.mxu0 0
    %116 = vmatpush.bf16.msra.mxu0 0
    %117 = vmatpush.bf16.msra.mxu0 0
    %118 = vmatpush.bf16.msra.mxu0 0
    %119 = vmatpush.bf16.msra.mxu0 0
    %120 = vmatpush.bf16.msra.mxu0 0
    %121 = vmatpush.bf16.msra.mxu0 0
    %122 = vmatpush.bf16.msra.mxu0 %v100
    %123 = vmatmul.bf16.gmra.mxu0 %v94
    %v124 = vpop.f32.mrf.mxu0
    %v125 = vadd.f32 0.0, %v124
    %v126 = vpop.f32.mrf.mxu0
    %127 = vdwg.mxu0
    %v128 = vpack.c.bf16 %v125, %v112
    %v130 = vrot.slane %v128, 2
    %v133 = vsel %vm56, %v128, %v130
    %135 = vst [vmem:[#allocation5] sm:$0xf] %v133
    %s136 = scalar_lea.vmem [#allocation2], 8
    %v137 = vld [vmem:[%s136] sm:$0xff]
    %139 = vst [vmem:[#allocation1] ss:$2 sm:$0xff] %v137
    %v140 = vld.sshfl [vmem:[#allocation1] sm:$0xff pattern:$0x75316420]
    %v141 = vld.sshfl [vmem:[#allocation1 + $0x8] sm:$0xff pattern:$0x75316420]
    %v144 = vpack.c.bf16 %v140, %v140
    %v145 = vpack.c.bf16 %v141, %v141
    %v147 = vsel %vm56, %v144, 0
    %v150 = vsel %vm56, %v145, 0
    %152 = vmatpush.bf16.msra.mxu0 0
    %153 = vmatpush.bf16.msra.mxu0 0
    %154 = vmatpush.bf16.msra.mxu0 0
    %155 = vmatpush.bf16.msra.mxu0 0
    %156 = vmatpush.bf16.msra.mxu0 0
    %157 = vmatpush.bf16.msra.mxu0 0
    %158 = vmatpush.bf16.msra.mxu0 0
    %159 = vmatpush.bf16.msra.mxu0 %v147
    %160 = vmatmul.bf16.gmra.mxu0 %v54
    %v161 = vpop.f32.mrf.mxu0
    %v162 = vadd.f32 %v50, %v161
    %v163 = vpop.f32.mrf.mxu0
    %164 = vdwg.mxu0
    %165 = vmatpush.bf16.msra.mxu0 0
    %166 = vmatpush.bf16.msra.mxu0 0
    %167 = vmatpush.bf16.msra.mxu0 0
    %168 = vmatpush.bf16.msra.mxu0 0
    %169 = vmatpush.bf16.msra.mxu0 0
    %170 = vmatpush.bf16.msra.mxu0 0
    %171 = vmatpush.bf16.msra.mxu0 0
    %172 = vmatpush.bf16.msra.mxu0 %v150
    %173 = vmatmul.bf16.gmra.mxu0 %v54
    %v174 = vpop.f32.mrf.mxu0
    %v175 = vadd.f32 %v50, %v174
    %v176 = vpop.f32.mrf.mxu0
    %177 = vdwg.mxu0
    %v178 = vmax.f32 %v162, 0.0
    %v179 = vmax.f32 %v175, 0.0
    %v180 = vpack.c.bf16 %v178, %v178
    %v181 = vpack.c.bf16 %v179, %v179
    %v183 = vsel %vm56, %v180, 0
    %v186 = vsel %vm56, %v181, 0
    %188 = vmatpush.bf16.msra.mxu0 0
    %189 = vmatpush.bf16.msra.mxu0 0
    %190 = vmatpush.bf16.msra.mxu0 0
    %191 = vmatpush.bf16.msra.mxu0 0
    %192 = vmatpush.bf16.msra.mxu0 0
    %193 = vmatpush.bf16.msra.mxu0 0
    %194 = vmatpush.bf16.msra.mxu0 0
    %195 = vmatpush.bf16.msra.mxu0 %v183
    %196 = vmatmul.bf16.gmra.mxu0 %v94
    %v197 = vpop.f32.mrf.mxu0
    %v198 = vadd.f32 0.0, %v197
    %v199 = vpop.f32.mrf.mxu0
    %200 = vdwg.mxu0
    %201 = vmatpush.bf16.msra.mxu0 0
    %202 = vmatpush.bf16.msra.mxu0 0
    %203 = vmatpush.bf16.msra.mxu0 0
    %204 = vmatpush.bf16.msra.mxu0 0
    %205 = vmatpush.bf16.msra.mxu0 0
    %206 = vmatpush.bf16.msra.mxu0 0
    %207 = vmatpush.bf16.msra.mxu0 0
    %208 = vmatpush.bf16.msra.mxu0 %v186
    %209 = vmatmul.bf16.gmra.mxu0 %v94
    %v210 = vpop.f32.mrf.mxu0
    %v211 = vadd.f32 0.0, %v210
    %v212 = vpop.f32.mrf.mxu0
    %213 = vdwg.mxu0
    %v214 = vpack.c.bf16 %v211, %v198
    %v216 = vrot.slane %v214, 2
    %v219 = vsel %vm56, %v214, %v216
    %s221 = scalar_lea.vmem [#allocation5], 4
    %222 = vst [vmem:[%s221] sm:$0xf] %v219
    // Predicated region
    $region22: #{tpu_custom_call.1} parent=1 // pred_check
      _
    $region23: #{tpu_custom_call.1} parent=1 // pred_check_branch
      %224 = sbr.rel (0) target = $region25
    $region24: #{tpu_custom_call.1} parent=1 // pred_region
      %226 = vsyncadd [#allocation4], 0
      %s227 = sshll.u32 [#allocation5], 4
      %s228 = int_to_ptr.vmem [resolvable:$true] %s227
      %s229 = sshll.u32 %s4, 4
      %s230 = int_to_ptr.hbm [resolvable:$true] %s229
      %235 = dma.vmem_to_hbm [thread:$0]  %s228, 128, %s230, [#allocation4], 64, 64, 4
    $region25: #{tpu_custom_call.1} parent=1 // pred_fallthru
      _
    // Predicated region
    $region26: #{tpu_custom_call.1} parent=1 // pred_check
      _
    $region27: #{tpu_custom_call.1} parent=1 // pred_check_branch
      %237 = sbr.rel (0) target = $region29
    $region28: #{tpu_custom_call.1} parent=1 // pred_region
      %239 = dma.done [#allocation4], 128
    $region29: #{tpu_custom_call.1} parent=1 // pred_fallthru
      _
    %240 = vsyncpa [#allocation3], 1
    %241 = vsyncpa [#allocation4], 1

</llo_original>
